<compile_context>
chip_gen: v6e
topology: v6e:2x2x1
jax: 0.10.0
libtpu: 0.0.40
codegen_flags: <defaults>
</compile_context>

<pallas_src>
import functools

import numpy as np
import jax
import jax.numpy as jnp
from jax.experimental import pallas as pl
from jax.experimental.pallas import tpu as pltpu


# ----------------------------------------------------------------------------
# Plain-Python helpers
# ----------------------------------------------------------------------------

def _round_up(x: int, m: int) -> int:
    return ((x + m - 1) // m) * m


def _prod(xs) -> int:
    r = 1
    for v in xs:
        r *= int(v)
    return r


def _interp_matrix_np(in_size: int, out_size: int) -> np.ndarray:
    """Bilinear (align_corners=False, no antialias) interpolation matrix.

    Matches torch.nn.functional.interpolate(..., mode='bilinear',
    align_corners=False). Returns (out_size, in_size) f32 M so that y = M @ x.
    Built in numpy once (and cached by the caller) so no per-call XLA scatters.
    """
    scale = in_size / out_size
    dst = np.arange(out_size, dtype=np.float64)
    src = (dst + 0.5) * scale - 0.5
    src = np.clip(src, 0.0, float(in_size - 1))
    i0 = np.floor(src).astype(np.int64)
    i1 = np.minimum(i0 + 1, in_size - 1)
    w1 = (src - i0).astype(np.float32)
    w0 = (1.0 - w1).astype(np.float32)
    m = np.zeros((out_size, in_size), np.float32)
    rows = np.arange(out_size)
    np.add.at(m, (rows, i0), w0)
    np.add.at(m, (rows, i1), w1)
    return m


def _compute_output_size(h, w, size, max_size):
    """torchvision size semantics (int -> short edge, truncating long edge)."""
    if isinstance(size, (tuple, list)) and len(size) == 1:
        size = size[0]
    if isinstance(size, int):
        short, long = (h, w) if h <= w else (w, h)
        new_short, new_long = size, int(size * long / short)
        if max_size is not None:
            if max_size <= size:
                raise ValueError("max_size must be strictly greater than size")
            if new_long > max_size:
                new_short, new_long = int(max_size * new_short / new_long), max_size
        out_h, out_w = (new_short, new_long) if h <= w else (new_long, new_short)
        return int(out_h), int(out_w)
    return int(size[0]), int(size[1])


# ----------------------------------------------------------------------------
# Generation-aware VMEM policy
# ----------------------------------------------------------------------------

def _tpu_vmem_bytes() -> int:
    try:
        if hasattr(pltpu, "get_tpu_info"):
            info = pltpu.get_tpu_info()
            v = int(getattr(info, "vmem_capacity_bytes", 0) or 0)
            if v > 0:
                return v
    except Exception:
        pass
    return 0


@functools.lru_cache(maxsize=None)
def _vmem_policy():
    """Returns (tile_budget_bytes, vmem_limit_cap_bytes, enforce_two_steps)."""
    vmem = _tpu_vmem_bytes()
    if vmem >= (96 << 20):
        # v5e / v6e / v4 / v5p class: 128 MiB physical VMEM, 1 TC per chip
        # (or megacore handled by "parallel" semantics) -> big tiles.
        return (96 << 20, 104 << 20, False)
    # v7x class (64 MiB per TC) or unknown: conservative budget, leave Mosaic
    # internal-scratch headroom, and keep >=2 grid steps so both TCs get work.
    return (28 << 20, 52 << 20, True)


def _per_image_vmem_bytes(h_pad, w, out_h, p, in_isz, out_isz, c_isz):
    """Conservative per-image VMEM footprint: pipelined blocks + f32 temps."""
    pipelined = 2 * h_pad * w * in_isz + 2 * out_h * p * out_isz
    intermediates = (h_pad * w * c_isz          # input cast to compute dtype
                     + 2 * h_pad * p * 4        # width-pass result + transpose (f32)
                     + 2 * out_h * p * 4)       # height-pass result + transpose (f32)
    return pipelined + intermediates


def _choose_b_tile(nc, per_img_bytes, usable_budget, enforce_two_steps):
    bt = max(1, usable_budget // max(per_img_bytes, 1))
    bt = int(min(bt, 512, nc))
    if enforce_two_steps and nc > 1:
        bt = min(bt, int(pl.cdiv(nc, 2)))       # >= 2 grid steps: feeds both v7x TCs
    return max(int(bt), 1)


@functools.lru_cache(maxsize=None)
def _single_buffered_weights_supported() -> bool:
    """One-time compile probe for pipeline_mode=pl.Buffered(1) (no runtime retry)."""
    try:
        spec = pl.BlockSpec((8, 128), lambda i: (0, 0),
                            pipeline_mode=pl.Buffered(buffer_count=1))

        def _k(x_ref, o_ref):
            o_ref[...] = x_ref[...]

        probe = pl.pallas_call(
            _k,
            out_shape=jax.ShapeDtypeStruct((8, 128), jnp.float32),
            grid=(1,),
            in_specs=[spec],
            out_specs=pl.BlockSpec((8, 128), lambda i: (0, 0)),
        )
        jax.jit(probe).lower(jax.ShapeDtypeStruct((8, 128), jnp.float32)).compile()
        return True
    except Exception:
        return False


# ----------------------------------------------------------------------------
# Pallas kernel
# ----------------------------------------------------------------------------

def _make_resize_kernel(b_tile, h_pad, w_in, out_h, p, clip_round):
    """p = out_w rounded up to 128 (lane-dense stores, no in-kernel slice)."""

    def kernel(x_ref, ww_ref, wht_ref, o_ref):
        cdt = ww_ref.dtype                                   # compute dtype (f32/bf16)
        x = x_ref[...].astype(cdt)                           # (B, H_pad, W)

        # Pass 1: width resize as ONE big MXU matmul over the whole block.
        #   (B*H_pad, W) @ (W, P) -> (B*H_pad, P)   (columns >= out_w are zero)
        xw = jnp.dot(x.reshape(b_tile * h_pad, w_in), ww_ref[...],
                     preferred_element_type=jnp.float32)

        # Bring H onto the lane axis (XLU), then pass 2:
        #   (B*P, H_pad) @ (H_pad, out_h) -> (B*P, out_h)
        xt = jnp.transpose(xw.reshape(b_tile, h_pad, p), (0, 2, 1))
        y = jnp.dot(xt.astype(cdt).reshape(b_tile * p, h_pad), wht_ref[...],
                    preferred_element_type=jnp.float32)

        y = jnp.transpose(y.reshape(b_tile, p, out_h), (0, 2, 1))   # (B, out_h, P)
        if clip_round is not None:                           # integer image dtypes
            lo, hi = clip_round
            y = jnp.clip(jnp.round(y), lo, hi)
        o_ref[...] = y.astype(o_ref.dtype)                   # full-lane (P) store

    return kernel


# ----------------------------------------------------------------------------
# Cached, jitted per-shape resize callable
# ----------------------------------------------------------------------------

@functools.lru_cache(maxsize=None)
def _get_resize_fn(nc, h, w, out_h, out_w, dtype_str, use_bf16):
    in_dtype = jnp.dtype(dtype_str)
    compute_bf16 = bool(use_bf16) or in_dtype == jnp.bfloat16
    w_dtype = jnp.bfloat16 if compute_bf16 else jnp.float32

    h_pad = _round_up(h, 8)
    p = _round_up(out_w, 128)                                # lane-dense output width

    # Interpolation matrices (numpy once; zero-padded to the working shapes).
    wh = _interp_matrix_np(h, out_h)                         # (out_h, H)
    ww = _interp_matrix_np(w, out_w)                         # (out_w, W)
    ww_np = np.zeros((w, p), np.float32)
    ww_np[:, :out_w] = ww.T
    wht_np = np.zeros((h_pad, out_h), np.float32)
    wht_np[:h, :] = wh.T
    ww_k = jnp.asarray(ww_np, dtype=w_dtype)                 # (W, P)
    wht_k = jnp.asarray(wht_np, dtype=w_dtype)               # (H_pad, out_h)

    in_isz = in_dtype.itemsize
    c_isz = jnp.dtype(w_dtype).itemsize
    budget, vmem_cap, two_steps = _vmem_policy()

    weight_bytes = (w * p + h_pad * out_h) * c_isz
    per_img = _per_image_vmem_bytes(h_pad, w, out_h, p, in_isz, in_isz, c_isz)
    usable = max(budget - 2 * weight_bytes - (2 << 20), per_img)
    b_tile = _choose_b_tile(nc, per_img, usable, two_steps)
    grid = int(pl.cdiv(nc, b_tile))

    clip_round = None
    if jnp.issubdtype(in_dtype, jnp.integer):
        ii = jnp.iinfo(in_dtype)
        clip_round = (float(ii.min), float(ii.max))

    vmem_est = b_tile * per_img + 2 * weight_bytes + (4 << 20)
    vmem_limit = int(min(max(vmem_est, 32 << 20), vmem_cap))

    kernel = _make_resize_kernel(b_tile, h_pad, w, out_h, p, clip_round)

    # Weight blocks never change across the grid -> single pipeline buffer.
    wkw = ({"pipeline_mode": pl.Buffered(buffer_count=1)}
           if _single_buffered_weights_supported() else {})

    call = pl.pallas_call(
        kernel,
        out_shape=jax.ShapeDtypeStruct((nc, out_h, p), in_dtype),
        grid_spec=pltpu.PrefetchScalarGridSpec(
            num_scalar_prefetch=0,
            grid=(grid,),                                    # cdiv: no NC padding copy,
            in_specs=[                                       # boundary writes are masked
                pl.BlockSpec((b_tile, h_pad, w), lambda b: (b, 0, 0)),
                pl.BlockSpec((w, p), lambda b: (0, 0), **wkw),
                pl.BlockSpec((h_pad, out_h), lambda b: (0, 0), **wkw),
            ],
            out_specs=pl.BlockSpec((b_tile, out_h, p), lambda b: (b, 0, 0)),
        ),
        compiler_params=pltpu.CompilerParams(
            dimension_semantics=("parallel",),
            vmem_limit_bytes=vmem_limit),
    )

    def fn(x_flat):
        if h_pad != h:
            # TODO(synk): move this pad into the kernel (zeroed VMEM staging)
            # to avoid an HBM round trip when h % 8 != 0.
            x_flat = jnp.pad(x_flat, ((0, 0), (0, h_pad - h), (0, 0)))
        y = call(x_flat, ww_k, wht_k)                        # (nc, out_h, P)
        return y[:, :, :out_w] if p != out_w else y

    return jax.jit(fn)


def bilinear_resize_flat(x_flat: jnp.ndarray, out_h: int, out_w: int,
                         bf16_compute: bool = False) -> jnp.ndarray:
    nc, h, w = (int(d) for d in x_flat.shape)
    fn = _get_resize_fn(nc, h, w, int(out_h), int(out_w),
                        str(jnp.dtype(x_flat.dtype)), bool(bf16_compute))
    return fn(x_flat)


def bilinear_resize_nchw(x: jnp.ndarray, size, max_size=None,
                         bf16_compute: bool = False) -> jnp.ndarray:
    """Resize a [..., H, W] tensor with bilinear interpolation (Pallas kernel)."""
    *lead, h, w = x.shape
    h, w = int(h), int(w)
    out_h, out_w = _compute_output_size(h, w, size, max_size)
    m = _prod(lead)
    out = bilinear_resize_flat(x.reshape(m, h, w), out_h, out_w, bf16_compute)
    return out.reshape(*[int(d) for d in lead], out_h, out_w)


# ----------------------------------------------------------------------------
# Module
# ----------------------------------------------------------------------------

class Resize:
    """JAX/Pallas equivalent of the PyTorch `Resize` module (bilinear only)."""

    # Only concatenate same-(H, W, dtype) tensors below this total size; large
    # tensors get their own pallas_call (concat + split = extra HBM round trip).
    _CONCAT_BYTES_LIMIT = 4 << 20

    def __init__(self, size, interpolation="bilinear", max_size=None, antialias=None,
                 bf16_compute=False):
        self.size = size
        self.interpolation = interpolation
        self.max_size = max_size
        self.antialias = antialias
        self.bf16_compute = bf16_compute
        # TODO(synk): only bilinear / antialias-disabled tensor semantics are
        # implemented (nearest/bicubic and antialias=True are not).

    def __call__(self, data_dict):
        out = {}
        small_groups = {}
        for k, v in data_dict.items():
            h, w = int(v.shape[-2]), int(v.shape[-1])
            nbytes = _prod(v.shape) * jnp.dtype(v.dtype).itemsize
            if nbytes <= self._CONCAT_BYTES_LIMIT:
                small_groups.setdefault((h, w, jnp.dtype(v.dtype)), []).append(k)
            else:
                out[k] = bilinear_resize_nchw(v, self.size, self.max_size,
                                              bf16_compute=self.bf16_compute)

        for (h, w, _dt), keys in small_groups.items():
            if len(keys) == 1:
                k = keys[0]
                out[k] = bilinear_resize_nchw(data_dict[k], self.size, self.max_size,
                                              bf16_compute=self.bf16_compute)
                continue
            out_h, out_w = _compute_output_size(h, w, self.size, self.max_size)
            flats, metas = [], []
            for k in keys:
                v = data_dict[k]
                lead = tuple(int(d) for d in v.shape[:-2])
                m = _prod(lead)
                flats.append(v.reshape(m, h, w))
                metas.append((k, lead, m))
            res = bilinear_resize_flat(jnp.concatenate(flats, axis=0), out_h, out_w,
                                       bf16_compute=self.bf16_compute)
            off = 0
            for k, lead, m in metas:
                out[k] = res[off:off + m].reshape(*lead, out_h, out_w)
                off += m
        return out

    def __repr__(self):
        return ("Resize(size={0}, interpolation={1}, max_size={2}, antialias={3})"
                .format(self.size, self.interpolation, self.max_size, self.antialias))


# ----------------------------------------------------------------------------
# Pure-JAX reference (same math, no Pallas) for the sanity check
# ----------------------------------------------------------------------------

def _reference_resize(x, size, max_size=None):
    n, c, h, w = x.shape
    out_h, out_w = _compute_output_size(int(h), int(w), size, max_size)
    wh = jnp.asarray(_interp_matrix_np(int(h), out_h))       # (out_h, H)
    ww = jnp.asarray(_interp_matrix_np(int(w), out_w))       # (out_w, W)
    xf = x.astype(jnp.float32)
    tmp = jnp.einsum("nchw,pw->nchp", xf, ww)                 # width first (mirrors kernel)
    ref = jnp.einsum("qh,nchp->ncqp", wh, tmp)
    return ref.astype(x.dtype)


if __name__ == "__main__":
    key = jax.random.PRNGKey(0)
    k1, k2, k3 = jax.random.split(key, 3)

    # Small, module-consistent shapes ([..., H, W] images).
    data = {
        "image": jax.random.normal(k1, (2, 4, 16, 16), dtype=jnp.float32),
        "label": jax.random.normal(k2, (2, 1, 16, 16), dtype=jnp.float32),
        "aux":   jax.random.normal(k3, (2, 2, 20, 24), dtype=jnp.float32),  # H % 8 != 0 path
    }

    resize = Resize(size=(8, 12))
    out = resize(data)
    out = jax.tree_util.tree_map(jax.block_until_ready, out)

    for name, v in data.items():
        ref = _reference_resize(v, (8, 12))
        assert out[name].shape == ref.shape, (name, out[name].shape, ref.shape)
        err = float(jnp.max(jnp.abs(out[name].astype(jnp.float32)
                                    - ref.astype(jnp.float32))))
        assert err < 1e-4, f"mismatch for {name}: {err}"

    print("KERNEL_OK")
</pallas_src>

<mosaic_0001>
module attributes {stable_mosaic.version = 11 : i64} {
  func.func @kernel(%arg0: i32, %arg1: memref<5x16x16xf32, #tpu.memory_space<vmem>>, %arg2: memref<16x128xf32, #tpu.memory_space<vmem>>, %arg3: memref<16x8xf32, #tpu.memory_space<vmem>>, %arg4: memref<5x8x128xf32, #tpu.memory_space<vmem>>) attributes {dimension_semantics = [#tpu.dimension_semantics<parallel>], iteration_bounds = array<i64: 2>, scalar_prefetch = 0 : i64, scratch_operands = 0 : i64, tpu.core_type = #tpu.core_type<tc>, window_params = [{transform_indices = @transform_0, window_bounds = array<i64: 5, 16, 16>}, {pipeline_mode = #tpu.pipeline_mode<synchronous>, transform_indices = @transform_1, window_bounds = array<i64: 16, 128>}, {pipeline_mode = #tpu.pipeline_mode<synchronous>, transform_indices = @transform_2, window_bounds = array<i64: 16, 8>}, {transform_indices = @transform_3, window_bounds = array<i64: 5, 8, 128>}]} {
    %c0 = arith.constant 0 : index
    %c0_0 = arith.constant 0 : index
    %c0_1 = arith.constant 0 : index
    %0 = vector.load %arg1[%c0, %c0_0, %c0_1] : memref<5x16x16xf32, #tpu.memory_space<vmem>>, vector<5x16x16xf32>
    %1 = vector.shape_cast %0 : vector<5x16x16xf32> to vector<80x16xf32>
    %c0_2 = arith.constant 0 : index
    %c0_3 = arith.constant 0 : index
    %2 = vector.load %arg2[%c0_2, %c0_3] : memref<16x128xf32, #tpu.memory_space<vmem>>, vector<16x128xf32>
    %cst = arith.constant dense<0.000000e+00> : vector<80x128xf32>
    %3 = tpu.matmul %1, %2, %cst {dimension_numbers = #tpu.dot_dimension_numbers<[1], [0], [0], [1], [0, 0, 1, 1], [], []>} : vector<80x16xf32>, vector<16x128xf32>, vector<80x128xf32> -> vector<80x128xf32>
    %4 = vector.shape_cast %3 : vector<80x128xf32> to vector<5x16x128xf32>
    %5 = tpu.transpose %4, [0, 2, 1] : vector<5x16x128xf32> -> vector<5x128x16xf32>
    %6 = vector.shape_cast %5 : vector<5x128x16xf32> to vector<640x16xf32>
    %c0_4 = arith.constant 0 : index
    %c0_5 = arith.constant 0 : index
    %7 = vector.load %arg3[%c0_4, %c0_5] : memref<16x8xf32, #tpu.memory_space<vmem>>, vector<16x8xf32>
    %cst_6 = arith.constant dense<0.000000e+00> : vector<640x8xf32>
    %8 = tpu.matmul %6, %7, %cst_6 {dimension_numbers = #tpu.dot_dimension_numbers<[1], [0], [0], [1], [0, 0, 1, 1], [], []>} : vector<640x16xf32>, vector<16x8xf32>, vector<640x8xf32> -> vector<640x8xf32>
    %9 = vector.shape_cast %8 : vector<640x8xf32> to vector<5x128x8xf32>
    %10 = tpu.transpose %9, [0, 2, 1] : vector<5x128x8xf32> -> vector<5x8x128xf32>
    %c0_7 = arith.constant 0 : index
    %c0_8 = arith.constant 0 : index
    %c0_9 = arith.constant 0 : index
    %11 = vector.load %arg4[%c0_7, %c0_8, %c0_9] : memref<5x8x128xf32, #tpu.memory_space<vmem>>, vector<5x8x128xf32>
    tpu.vector_store %arg4[%c0_7, %c0_8, %c0_9], %10 {strides = array<i32>} : memref<5x8x128xf32, #tpu.memory_space<vmem>>, vector<5x8x128xf32>,
    return
  }
  func.func @transform_0(%arg0: i32) -> (i32, i32, i32) {
    %c0_i32 = arith.constant 0 : i32
    %c0_i32_0 = arith.constant 0 : i32
    %c0_i32_1 = arith.constant 0 : i32
    return %arg0, %c0_i32, %c0_i32_0 : i32, i32, i32
  }
  func.func @transform_1(%arg0: i32) -> (i32, i32) {
    %c0_i32 = arith.constant 0 : i32
    %c0_i32_0 = arith.constant 0 : i32
    %c0_i32_1 = arith.constant 0 : i32
    return %c0_i32, %c0_i32_0 : i32, i32
  }
  func.func @transform_2(%arg0: i32) -> (i32, i32) {
    %c0_i32 = arith.constant 0 : i32
    %c0_i32_0 = arith.constant 0 : i32
    %c0_i32_1 = arith.constant 0 : i32
    return %c0_i32, %c0_i32_0 : i32, i32
  }
  func.func @transform_3(%arg0: i32) -> (i32, i32, i32) {
    %c0_i32 = arith.constant 0 : i32
    %c0_i32_0 = arith.constant 0 : i32
    %c0_i32_1 = arith.constant 0 : i32
    return %arg0, %c0_i32, %c0_i32_0 : i32, i32, i32
  }
}

</mosaic_0001>

<llo_original>
// kernel: fn.1
$region0: #{fn.1}
  #allocation0 [shape = 'u32[]', space=smem, size = 0x4, offset = 0x4, fixed_abs, tag = 'smem constant byte address 0x4 - core index']
  #allocation1 [shape = 'u32[144,128]{1,0:T(1,128)}', space=vmem, size = 0x12000, scoped, tag = 'internal scratch']
  %s0 = inlined_call_operand.hbm [shape: f32[10,16,16], index: 0, kind: input, shape index: {}]
  %s1 = inlined_call_operand.hbm [shape: f32[16,128], index: 1, kind: input, shape index: {}]
  %s2 = inlined_call_operand.hbm [shape: f32[16,8], index: 2, kind: input, shape index: {}]
  %s3 = inlined_call_operand.hbm [shape: f32[10,8,128], index: 3, kind: output, shape index: {}]
  %s4 = sld [smem:[#allocation0]]
  $region57: #{fn.1} parent=0
    _
  %s6 = ssub.s32 1, %s4
  %s7 = scalar_select 0, %s6, %s4
  $region1: #{fn.1} parent=0
    #allocation2 [shape = 'u8[81920]{0}', space=vmem, size = 0x14000, scoped, tag = 'input window, operand 0']
    #allocation3 [shape = 's32[2]{0}', space=sflag, size = 0x8, scoped, tag = 'scoped memory for fn.1']
    #allocation4 [shape = 's32[2]{0}', space=sflag, size = 0x8, scoped, tag = 'scoped memory for fn.1']
    #allocation5 [shape = 'u8[8192]{0}', space=vmem, size = 0x2000, scoped, tag = 'input window, operand 1, single buffered']
    #allocation6 [shape = 's32[1]{0}', space=sflag, size = 0x4, scoped, tag = 'scoped memory for fn.1']
    #allocation7 [shape = 'u8[8192]{0}', space=vmem, size = 0x2000, scoped, tag = 'input window, operand 2, single buffered']
    #allocation8 [shape = 'u8[40960]{0}', space=vmem, size = 0xa000, scoped, tag = 'output window, operand 0']
    %8 = vsyncpa [#allocation3], 0
    %s9 = scalar_lea.sflag [#allocation3], 1
    %10 = vsyncpa %s9, 0
    %11 = vsyncpa [#allocation6], 0
    %12 = vsyncpa [#allocation4], 0
    %s13 = scalar_lea.sflag [#allocation4], 1
    %14 = vsyncpa %s13, 0
    loop: start=0, step=1, limit=4
    $region2: #{fn.1} parent=1 // loop_pre_header
      _
    $region3: #{fn.1} parent=1 // loop_header
      %s16 = sphi 0, %s20
      %p17 = scmp.ge.s32.totalorder %s16, 4
      %s26 = sphi 0, %s28
      %s29 = sphi 0, %s26
      %s30 = sphi 0, %s29
      %s46 = sphi 0, %s30
      %s50 = sphi 0, %s50
      %s52 = sphi 0, %s50
      %s53 = sphi 0, %s52
      %s67 = sphi 0, %s53
      %s71 = sphi 0, %s71
      %s73 = sphi 0, %s71
      %s74 = sphi 0, %s73
      %s88 = sphi 0, %s74
      %s94 = sphi 0, %s96
      %s97 = sphi 0, %s94
      %s98 = sphi 0, %s97
      %s114 = sphi 0, %s98
    $region4: #{fn.1} parent=1 // loop_header_branch
      %19 = sbr.rel (%p17) target = $region8
    $region5: #{fn.1} parent=1 // loop_body
      %s21 = ssub.s32 %s16, 1
      %s22 = ssub.s32 %s16, 2
      %s23 = sadd.s32 %s16, 1
      %s24 = ssub.s32 %s16, %s23
      %p25 = scmp.eq.s32.totalorder %s24, 0
      %s27 = sadd.s32 %s26, 1
      %s28 = scalar_select %p25, %s26, %s27
      %p31 = pneg %p25
      %p32 = scmp.eq.s32.totalorder %s16, 1
      %p33 = por %p31, %p32
      %p34 = scmp.ne.s32.totalorder %s26, %s29
      %p35 = scmp.eq.s32.totalorder %s16, 0
      %p36 = por %p34, %p35
      %p37 = scmp.ne.s32.totalorder %s26, %s29
      %p38 = scmp.eq.s32.totalorder %s21, 1
      %p39 = por %p37, %p38
      %p40 = scmp.ne.s32.totalorder %s29, %s30
      %p41 = scmp.eq.s32.totalorder %s21, 0
      %p42 = por %p40, %p41
      %p43 = scmp.ne.s32.totalorder %s29, %s30
      %p44 = scmp.eq.s32.totalorder %s22, 1
      %p45 = por %p43, %p44
      %p47 = scmp.ne.s32.totalorder %s30, %s46
      %p48 = scmp.eq.s32.totalorder %s22, 0
      %p49 = por %p47, %p48
      %s51 = sadd.s32 %s50, 1
      %p54 = scmp.eq.s32.totalorder %s16, 1
      %p55 = scmp.ne.s32.totalorder %s50, %s52
      %p56 = scmp.eq.s32.totalorder %s16, 0
      %p57 = por %p55, %p56
      %p58 = scmp.ne.s32.totalorder %s50, %s52
      %p59 = scmp.eq.s32.totalorder %s21, 1
      %p60 = por %p58, %p59
      %p61 = scmp.ne.s32.totalorder %s52, %s53
      %p62 = scmp.eq.s32.totalorder %s21, 0
      %p63 = por %p61, %p62
      %p64 = scmp.ne.s32.totalorder %s52, %s53
      %p65 = scmp.eq.s32.totalorder %s22, 1
      %p66 = por %p64, %p65
      %p68 = scmp.ne.s32.totalorder %s53, %s67
      %p69 = scmp.eq.s32.totalorder %s22, 0
      %p70 = por %p68, %p69
      %s72 = sadd.s32 %s71, 1
      %p75 = scmp.eq.s32.totalorder %s16, 1
      %p76 = scmp.ne.s32.totalorder %s71, %s73
      %p77 = scmp.eq.s32.totalorder %s16, 0
      %p78 = por %p76, %p77
      %p79 = scmp.ne.s32.totalorder %s71, %s73
      %p80 = scmp.eq.s32.totalorder %s21, 1
      %p81 = por %p79, %p80
      %p82 = scmp.ne.s32.totalorder %s73, %s74
      %p83 = scmp.eq.s32.totalorder %s21, 0
      %p84 = por %p82, %p83
      %p85 = scmp.ne.s32.totalorder %s73, %s74
      %p86 = scmp.eq.s32.totalorder %s22, 1
      %p87 = por %p85, %p86
      %p89 = scmp.ne.s32.totalorder %s74, %s88
      %p90 = scmp.eq.s32.totalorder %s22, 0
      %p91 = por %p89, %p90
      %s92 = ssub.s32 %s16, %s23
      %p93 = scmp.eq.s32.totalorder %s92, 0
      %s95 = sadd.s32 %s94, 1
      %s96 = scalar_select %p93, %s94, %s95
      %p99 = pneg %p93
      %p100 = scmp.eq.s32.totalorder %s16, 1
      %p101 = por %p99, %p100
      %p102 = scmp.ne.s32.totalorder %s94, %s97
      %p103 = scmp.eq.s32.totalorder %s16, 0
      %p104 = por %p102, %p103
      %p105 = scmp.ne.s32.totalorder %s94, %s97
      %p106 = scmp.eq.s32.totalorder %s21, 1
      %p107 = por %p105, %p106
      %p108 = scmp.ne.s32.totalorder %s97, %s98
      %p109 = scmp.eq.s32.totalorder %s21, 0
      %p110 = por %p108, %p109
      %p111 = scmp.ne.s32.totalorder %s97, %s98
      %p112 = scmp.eq.s32.totalorder %s22, 1
      %p113 = por %p111, %p112
      %p115 = scmp.ne.s32.totalorder %s98, %s114
      %p116 = scmp.eq.s32.totalorder %s22, 0
      %p117 = por %p115, %p116
      %p118 = scmp.le.s32.totalorder 1, %s16
      %p119 = scmp.lt.s32.totalorder %s16, 3
      %p120 = pnand %p118, %p119
      %p121 = pneg %p120
      // Predicated region
      $region9: #{fn.1} parent=5 // pred_check
        _
      $region10: #{fn.1} parent=5 // pred_check_branch
        %123 = sbr.rel (%p120) target = $region12
      $region11: #{fn.1} parent=5 // pred_region
        %s124 = ssub.s32 %s16, 1
        // Predicated region
        $region13: #{fn.1} parent=11 // pred_check
          %p125 = pneg %p63
        $region14: #{fn.1} parent=11 // pred_check_branch
          %127 = sbr.rel (%p125) target = $region16
        $region15: #{fn.1} parent=11 // pred_region
          %s129 = ssub.s32 256, 256
          %130 = vsyncadd [#allocation6], %s129
          %s131 = sshll.u32 [#allocation5], 4
          %s132 = int_to_ptr.vmem [resolvable:$true] %s131
          %137 = dma.hbm_to_vmem [thread:$0]  %s1, 256, %s132, [#allocation6], 128, 128, 8
        $region16: #{fn.1} parent=11 // pred_fallthru
          _
        // Predicated region
        $region17: #{fn.1} parent=11 // pred_check
          %p138 = pneg %p84
        $region18: #{fn.1} parent=11 // pred_check_branch
          %140 = sbr.rel (%p138) target = $region20
        $region19: #{fn.1} parent=11 // pred_region
          %s142 = ssub.s32 256, 256
          %143 = vsyncadd [#allocation6], %s142
          %s144 = sshll.u32 [#allocation7], 4
          %s145 = int_to_ptr.vmem [resolvable:$true] %s144
          %150 = dma.hbm_to_vmem [thread:$0]  %s2, 256, %s145, [#allocation6], 128, 128, 8
        $region20: #{fn.1} parent=11 // pred_fallthru
          _
      $region12: #{fn.1} parent=5 // pred_fallthru
        _
      %p151 = scmp.lt.s32.totalorder %s16, 2
      // Predicated region
      $region21: #{fn.1} parent=5 // pred_check
        %p152 = pneg %p151
      $region22: #{fn.1} parent=5 // pred_check_branch
        %154 = sbr.rel (%p152) target = $region24
      $region23: #{fn.1} parent=5 // pred_region
        // Predicated region
        $region25: #{fn.1} parent=23 // pred_check
          %p155 = pneg %p36
        $region26: #{fn.1} parent=23 // pred_check_branch
          %157 = sbr.rel (%p155) target = $region28
        $region27: #{fn.1} parent=23 // pred_region
          %s158 = sand.u32 %s26, 1
          %s159 = scalar_lea.sflag [#allocation3], %s158
          %s160 = sand.u32 %s26, 1
          %s161 = smul.addr %s160, 80
          %s162 = scalar_lea.vmem [#allocation2], %s161
          %s163 = smul.u32 5, %s16
          %s165 = ssub.s32 1280, 1280
          %166 = vsyncadd %s159, %s165
          %s167 = smul.addr %s163, 2
          %s168 = smul.addr %s167, 128
          %s169 = scalar_lea.hbm %s0, %s168
          %s170 = sshll.u32 %s162, 4
          %s171 = int_to_ptr.vmem [resolvable:$true] %s170
          %176 = dma.hbm_to_vmem [thread:$0]  %s169, 1280, %s171, %s159, 128, 128, 8
        $region28: #{fn.1} parent=23 // pred_fallthru
          _
      $region24: #{fn.1} parent=5 // pred_fallthru
        _
      %p177 = scmp.le.s32.totalorder 1, %s16
      %p178 = scmp.lt.s32.totalorder %s16, 3
      %p179 = pnand %p177, %p178
      %p180 = pneg %p179
      // Predicated region
      $region29: #{fn.1} parent=5 // pred_check
        _
      $region30: #{fn.1} parent=5 // pred_check_branch
        %182 = sbr.rel (%p179) target = $region32
      $region31: #{fn.1} parent=5 // pred_region
        %s183 = ssub.s32 %s16, 1
        %s184 = sand.u32 %s29, 1
        %s185 = scalar_lea.sflag [#allocation3], %s184
        %s186 = sand.u32 %s29, 1
        %s187 = smul.addr %s186, 80
        %s188 = scalar_lea.vmem [#allocation2], %s187
        // Predicated region
        $region33: #{fn.1} parent=31 // pred_check
          %p189 = pneg %p42
        $region34: #{fn.1} parent=31 // pred_check_branch
          %191 = sbr.rel (%p189) target = $region36
        $region35: #{fn.1} parent=31 // pred_region
          %192 = dma.done %s185, 1280
        $region36: #{fn.1} parent=31 // pred_fallthru
          _
        // Predicated region
        $region37: #{fn.1} parent=31 // pred_check
          %p193 = pneg %p63
        $region38: #{fn.1} parent=31 // pred_check_branch
          %195 = sbr.rel (%p193) target = $region40
        $region39: #{fn.1} parent=31 // pred_region
          %196 = dma.done [#allocation6], 256
        $region40: #{fn.1} parent=31 // pred_fallthru
          _
        // Predicated region
        $region41: #{fn.1} parent=31 // pred_check
          %p197 = pneg %p84
        $region42: #{fn.1} parent=31 // pred_check_branch
          %199 = sbr.rel (%p197) target = $region44
        $region43: #{fn.1} parent=31 // pred_region
          %200 = dma.done [#allocation6], 256
        $region44: #{fn.1} parent=31 // pred_fallthru
          _
        %s201 = sand.u32 %s29, 1
        %s202 = scalar_lea.sflag [#allocation3], %s201
        %s203 = sand.u32 %s29, 1
        %s204 = smul.addr %s203, 80
        %s205 = scalar_lea.vmem [#allocation2], %s204
        %p206 = pneg %p42
        %p207 = pneg %p39
        %p208 = pneg %p63
        %p209 = pneg %p60
        %p210 = pneg %p84
        %p211 = pneg %p81
        %p212 = pneg %p110
        %p213 = pneg %p107
        %s214 = sand.u32 %s97, 1
        %s215 = scalar_lea.sflag [#allocation4], %s214
        %s216 = sand.u32 %s97, 1
        %s217 = smul.addr %s216, 40
        %s218 = scalar_lea.vmem [#allocation8], %s217
        %s219 = smul.u32 5, %s21
        %s220 = smul.u32 5, %s21
        %v221 = vld [vmem:[%s188] sm:$0xff]
        %v222 = vld [vmem:[%s188 + $0x8] sm:$0xff]
        %v223 = vld [vmem:[%s188 + $0x10] sm:$0xff]
        %v224 = vld [vmem:[%s188 + $0x18] sm:$0xff]
        %v225 = vld [vmem:[%s188 + $0x20] sm:$0xff]
        %v226 = vld [vmem:[%s188 + $0x28] sm:$0xff]
        %v227 = vld [vmem:[%s188 + $0x30] sm:$0xff]
        %v228 = vld [vmem:[%s188 + $0x38] sm:$0xff]
        %v229 = vld [vmem:[%s188 + $0x40] sm:$0xff]
        %v230 = vld [vmem:[%s188 + $0x48] sm:$0xff]
        %v231 = vld [vmem:[#allocation5] sm:$0xff]
        %v232 = vld [vmem:[#allocation5 + $0x8] sm:$0xff]
        %vm233 = vcmask 130048
        %v235 = vsel %vm233, %v221, 0
        %v238 = vsel %vm233, %v222, 0
        %v241 = vsel %vm233, %v223, 0
        %v244 = vsel %vm233, %v224, 0
        %v247 = vsel %vm233, %v225, 0
        %v250 = vsel %vm233, %v226, 0
        %v253 = vsel %vm233, %v227, 0
        %v256 = vsel %vm233, %v228, 0
        %v259 = vsel %vm233, %v229, 0
        %v262 = vsel %vm233, %v230, 0
        %264 = vmatprep.subr.mxu0 0.0
        %265 = vmatpush1.msra.mxu0 0.0
        %266 = vmatprep.subr.mxu0 0.0
        %267 = vmatpush1.msra.mxu0 0.0
        %268 = vmatprep.subr.mxu0 0.0
        %269 = vmatpush1.msra.mxu0 0.0
        %270 = vmatprep.subr.mxu0 0.0
        %271 = vmatpush1.msra.mxu0 0.0
        %272 = vmatprep.subr.mxu0 0.0
        %273 = vmatpush1.msra.mxu0 0.0
        %274 = vmatprep.subr.mxu0 0.0
        %275 = vmatpush1.msra.mxu0 0.0
        %276 = vmatprep.subr.mxu0 0.0
        %277 = vmatpush1.msra.mxu0 0.0
        %278 = vmatprep.subr.mxu0 0.0
        %279 = vmatpush1.msra.mxu0 0.0
        %280 = vmatprep.subr.mxu0 0.0
        %281 = vmatpush1.msra.mxu0 0.0
        %282 = vmatprep.subr.mxu0 0.0
        %283 = vmatpush1.msra.mxu0 0.0
        %284 = vmatprep.subr.mxu0 0.0
        %285 = vmatpush1.msra.mxu0 0.0
        %286 = vmatprep.subr.mxu0 0.0
        %287 = vmatpush1.msra.mxu0 0.0
        %288 = vmatprep.subr.mxu0 0.0
        %289 = vmatpush1.msra.mxu0 0.0
        %290 = vmatprep.subr.mxu0 0.0
        %291 = vmatpush1.msra.mxu0 0.0
        %292 = vmatprep.subr.mxu0 0.0
        %293 = vmatpush1.msra.mxu0 %v232
        %294 = vmatprep.subr.mxu0 0.0
        %295 = vmatpush1.msra.mxu0 %v231
        %296 = vmatprep.subr.mxu0 0.0
        %297 = vmatpush2.msra.mxu0 0.0
        %298 = vmatprep.subr.mxu0 0.0
        %299 = vmatpush2.msra.mxu0 0.0
        %300 = vmatprep.subr.mxu0 0.0
        %301 = vmatpush2.msra.mxu0 0.0
        %302 = vmatprep.subr.mxu0 0.0
        %303 = vmatpush2.msra.mxu0 0.0
        %304 = vmatprep.subr.mxu0 0.0
        %305 = vmatpush2.msra.mxu0 0.0
        %306 = vmatprep.subr.mxu0 0.0
        %307 = vmatpush2.msra.mxu0 0.0
        %308 = vmatprep.subr.mxu0 0.0
        %309 = vmatpush2.msra.mxu0 0.0
        %310 = vmatprep.subr.mxu0 0.0
        %311 = vmatpush2.msra.mxu0 0.0
        %312 = vmatprep.subr.mxu0 0.0
        %313 = vmatpush2.msra.mxu0 0.0
        %314 = vmatprep.subr.mxu0 0.0
        %315 = vmatpush2.msra.mxu0 0.0
        %316 = vmatprep.subr.mxu0 0.0
        %317 = vmatpush2.msra.mxu0 0.0
        %318 = vmatprep.subr.mxu0 0.0
        %319 = vmatpush2.msra.mxu0 0.0
        %320 = vmatprep.subr.mxu0 0.0
        %321 = vmatpush2.msra.mxu0 0.0
        %322 = vmatprep.subr.mxu0 0.0
        %323 = vmatpush2.msra.mxu0 0.0
        %324 = vmatprep.subr.mxu0 0.0
        %325 = vmatpush2.msra.mxu0 0.0
        %326 = vmatprep.subr.mxu0 0.0
        %327 = vmatpush2.msra.mxu0 0.0
        %328 = vmatprep.mubr.f32.mxu0 0.0
        %329 = vmatmul.mubr.f32.gmra.mxu0 %v235
        %v330 = vpop.f32.mrf.mxu0
        %v331 = vadd.f32 0.0, %v330
        %v332 = vpop.f32.mrf.mxu0
        %333 = vmatprep.mubr.f32.mxu0 0.0
        %334 = vmatmul.mubr.f32.gmra.mxu0 %v238
        %v335 = vpop.f32.mrf.mxu0
        %v336 = vadd.f32 0.0, %v335
        %v337 = vpop.f32.mrf.mxu0
        %338 = vmatprep.mubr.f32.mxu0 0.0
        %339 = vmatmul.mubr.f32.gmra.mxu0 %v241
        %v340 = vpop.f32.mrf.mxu0
        %v341 = vadd.f32 0.0, %v340
        %v342 = vpop.f32.mrf.mxu0
        %343 = vmatprep.mubr.f32.mxu0 0.0
        %344 = vmatmul.mubr.f32.gmra.mxu0 %v244
        %v345 = vpop.f32.mrf.mxu0
        %v346 = vadd.f32 0.0, %v345
        %v347 = vpop.f32.mrf.mxu0
        %348 = vmatprep.mubr.f32.mxu0 0.0
        %349 = vmatmul.mubr.f32.gmra.mxu0 %v247
        %v350 = vpop.f32.mrf.mxu0
        %v351 = vadd.f32 0.0, %v350
        %v352 = vpop.f32.mrf.mxu0
        %353 = vmatprep.mubr.f32.mxu0 0.0
        %354 = vmatmul.mubr.f32.gmra.mxu0 %v250
        %v355 = vpop.f32.mrf.mxu0
        %v356 = vadd.f32 0.0, %v355
        %v357 = vpop.f32.mrf.mxu0
        %358 = vmatprep.mubr.f32.mxu0 0.0
        %359 = vmatmul.mubr.f32.gmra.mxu0 %v253
        %v360 = vpop.f32.mrf.mxu0
        %v361 = vadd.f32 0.0, %v360
        %v362 = vpop.f32.mrf.mxu0
        %363 = vmatprep.mubr.f32.mxu0 0.0
        %364 = vmatmul.mubr.f32.gmra.mxu0 %v256
        %v365 = vpop.f32.mrf.mxu0
        %v366 = vadd.f32 0.0, %v365
        %v367 = vpop.f32.mrf.mxu0
        %368 = vmatprep.mubr.f32.mxu0 0.0
        %369 = vmatmul.mubr.f32.gmra.mxu0 %v259
        %v370 = vpop.f32.mrf.mxu0
        %v371 = vadd.f32 0.0, %v370
        %v372 = vpop.f32.mrf.mxu0
        %373 = vmatprep.mubr.f32.mxu0 0.0
        %374 = vmatmul.mubr.f32.gmra.mxu0 %v262
        %v375 = vpop.f32.mrf.mxu0
        %v376 = vadd.f32 0.0, %v375
        %v377 = vpop.f32.mrf.mxu0
        %378 = vdwg.mxu0
        %379 = vxpose.xlu0.b32.start [1/16] %v331, 128
        %380 = vxpose.xlu0.b32.cont [2/16] %v336, 128
        %381 = vxpose.xlu0.b32.cont [3/16] 0.0, 128
        %382 = vxpose.xlu0.b32.cont [4/16] 0.0, 128
        %383 = vxpose.xlu0.b32.cont [5/16] 0.0, 128
        %384 = vxpose.xlu0.b32.cont [6/16] 0.0, 128
        %385 = vxpose.xlu0.b32.cont [7/16] 0.0, 128
        %386 = vxpose.xlu0.b32.cont [8/16] 0.0, 128
        %387 = vxpose.xlu0.b32.cont [9/16] 0.0, 128
        %388 = vxpose.xlu0.b32.cont [10/16] 0.0, 128
        %389 = vxpose.xlu0.b32.cont [11/16] 0.0, 128
        %390 = vxpose.xlu0.b32.cont [12/16] 0.0, 128
        %391 = vxpose.xlu0.b32.cont [13/16] 0.0, 128
        %392 = vxpose.xlu0.b32.cont [14/16] 0.0, 128
        %393 = vxpose.xlu0.b32.cont [15/16] 0.0, 128
        %394 = vxpose.xlu0.b32.end [16/16] 0.0, 128
        %v395 = vpop.trf.xlu0
        %v396 = vpop.trf.xlu0
        %v397 = vpop.trf.xlu0
        %v398 = vpop.trf.xlu0
        %v399 = vpop.trf.xlu0
        %v400 = vpop.trf.xlu0
        %v401 = vpop.trf.xlu0
        %v402 = vpop.trf.xlu0
        %v403 = vpop.trf.xlu0
        %v404 = vpop.trf.xlu0
        %v405 = vpop.trf.xlu0
        %v406 = vpop.trf.xlu0
        %v407 = vpop.trf.xlu0
        %v408 = vpop.trf.xlu0
        %v409 = vpop.trf.xlu0
        %v410 = vpop.trf.xlu0
        %411 = vxpose.xlu0.b32.start [1/16] %v341, 128
        %412 = vxpose.xlu0.b32.cont [2/16] %v346, 128
        %413 = vxpose.xlu0.b32.cont [3/16] 0.0, 128
        %414 = vxpose.xlu0.b32.cont [4/16] 0.0, 128
        %415 = vxpose.xlu0.b32.cont [5/16] 0.0, 128
        %416 = vxpose.xlu0.b32.cont [6/16] 0.0, 128
        %417 = vxpose.xlu0.b32.cont [7/16] 0.0, 128
        %418 = vxpose.xlu0.b32.cont [8/16] 0.0, 128
        %419 = vxpose.xlu0.b32.cont [9/16] 0.0, 128
        %420 = vxpose.xlu0.b32.cont [10/16] 0.0, 128
        %421 = vxpose.xlu0.b32.cont [11/16] 0.0, 128
        %422 = vxpose.xlu0.b32.cont [12/16] 0.0, 128
        %423 = vxpose.xlu0.b32.cont [13/16] 0.0, 128
        %424 = vxpose.xlu0.b32.cont [14/16] 0.0, 128
        %425 = vxpose.xlu0.b32.cont [15/16] 0.0, 128
        %426 = vxpose.xlu0.b32.end [16/16] 0.0, 128
        %v427 = vpop.trf.xlu0
        %v428 = vpop.trf.xlu0
        %v429 = vpop.trf.xlu0
        %v430 = vpop.trf.xlu0
        %v431 = vpop.trf.xlu0
        %v432 = vpop.trf.xlu0
        %v433 = vpop.trf.xlu0
        %v434 = vpop.trf.xlu0
        %v435 = vpop.trf.xlu0
        %v436 = vpop.trf.xlu0
        %v437 = vpop.trf.xlu0
        %v438 = vpop.trf.xlu0
        %v439 = vpop.trf.xlu0
        %v440 = vpop.trf.xlu0
        %v441 = vpop.trf.xlu0
        %v442 = vpop.trf.xlu0
        %443 = vxpose.xlu0.b32.start [1/16] %v351, 128
        %444 = vxpose.xlu0.b32.cont [2/16] %v356, 128
        %445 = vxpose.xlu0.b32.cont [3/16] 0.0, 128
        %446 = vxpose.xlu0.b32.cont [4/16] 0.0, 128
        %447 = vxpose.xlu0.b32.cont [5/16] 0.0, 128
        %448 = vxpose.xlu0.b32.cont [6/16] 0.0, 128
        %449 = vxpose.xlu0.b32.cont [7/16] 0.0, 128
        %450 = vxpose.xlu0.b32.cont [8/16] 0.0, 128
        %451 = vxpose.xlu0.b32.cont [9/16] 0.0, 128
        %452 = vxpose.xlu0.b32.cont [10/16] 0.0, 128
        %453 = vxpose.xlu0.b32.cont [11/16] 0.0, 128
        %454 = vxpose.xlu0.b32.cont [12/16] 0.0, 128
        %455 = vxpose.xlu0.b32.cont [13/16] 0.0, 128
        %456 = vxpose.xlu0.b32.cont [14/16] 0.0, 128
        %457 = vxpose.xlu0.b32.cont [15/16] 0.0, 128
        %458 = vxpose.xlu0.b32.end [16/16] 0.0, 128
        %v459 = vpop.trf.xlu0
        %v460 = vpop.trf.xlu0
        %v461 = vpop.trf.xlu0
        %v462 = vpop.trf.xlu0
        %v463 = vpop.trf.xlu0
        %v464 = vpop.trf.xlu0
        %v465 = vpop.trf.xlu0
        %v466 = vpop.trf.xlu0
        %v467 = vpop.trf.xlu0
        %v468 = vpop.trf.xlu0
        %v469 = vpop.trf.xlu0
        %v470 = vpop.trf.xlu0
        %v471 = vpop.trf.xlu0
        %v472 = vpop.trf.xlu0
        %v473 = vpop.trf.xlu0
        %v474 = vpop.trf.xlu0
        %475 = vxpose.xlu0.b32.start [1/16] %v361, 128
        %476 = vxpose.xlu0.b32.cont [2/16] %v366, 128
        %477 = vxpose.xlu0.b32.cont [3/16] 0.0, 128
        %478 = vxpose.xlu0.b32.cont [4/16] 0.0, 128
        %479 = vxpose.xlu0.b32.cont [5/16] 0.0, 128
        %480 = vxpose.xlu0.b32.cont [6/16] 0.0, 128
        %481 = vxpose.xlu0.b32.cont [7/16] 0.0, 128
        %482 = vxpose.xlu0.b32.cont [8/16] 0.0, 128
        %483 = vxpose.xlu0.b32.cont [9/16] 0.0, 128
        %484 = vxpose.xlu0.b32.cont [10/16] 0.0, 128
        %485 = vxpose.xlu0.b32.cont [11/16] 0.0, 128
        %486 = vxpose.xlu0.b32.cont [12/16] 0.0, 128
        %487 = vxpose.xlu0.b32.cont [13/16] 0.0, 128
        %488 = vxpose.xlu0.b32.cont [14/16] 0.0, 128
        %489 = vxpose.xlu0.b32.cont [15/16] 0.0, 128
        %490 = vxpose.xlu0.b32.end [16/16] 0.0, 128
        %v491 = vpop.trf.xlu0
        %v492 = vpop.trf.xlu0
        %v493 = vpop.trf.xlu0
        %v494 = vpop.trf.xlu0
        %v495 = vpop.trf.xlu0
        %v496 = vpop.trf.xlu0
        %v497 = vpop.trf.xlu0
        %v498 = vpop.trf.xlu0
        %v499 = vpop.trf.xlu0
        %v500 = vpop.trf.xlu0
        %v501 = vpop.trf.xlu0
        %v502 = vpop.trf.xlu0
        %v503 = vpop.trf.xlu0
        %v504 = vpop.trf.xlu0
        %v505 = vpop.trf.xlu0
        %v506 = vpop.trf.xlu0
        %507 = vxpose.xlu0.b32.start [1/16] %v371, 128
        %508 = vxpose.xlu0.b32.cont [2/16] %v376, 128
        %509 = vxpose.xlu0.b32.cont [3/16] 0.0, 128
        %510 = vxpose.xlu0.b32.cont [4/16] 0.0, 128
        %511 = vxpose.xlu0.b32.cont [5/16] 0.0, 128
        %512 = vxpose.xlu0.b32.cont [6/16] 0.0, 128
        %513 = vxpose.xlu0.b32.cont [7/16] 0.0, 128
        %514 = vxpose.xlu0.b32.cont [8/16] 0.0, 128
        %515 = vxpose.xlu0.b32.cont [9/16] 0.0, 128
        %516 = vxpose.xlu0.b32.cont [10/16] 0.0, 128
        %517 = vxpose.xlu0.b32.cont [11/16] 0.0, 128
        %518 = vxpose.xlu0.b32.cont [12/16] 0.0, 128
        %519 = vxpose.xlu0.b32.cont [13/16] 0.0, 128
        %520 = vxpose.xlu0.b32.cont [14/16] 0.0, 128
        %521 = vxpose.xlu0.b32.cont [15/16] 0.0, 128
        %522 = vxpose.xlu0.b32.end [16/16] 0.0, 128
        %v523 = vpop.trf.xlu0
        %v524 = vpop.trf.xlu0
        %v525 = vpop.trf.xlu0
        %v526 = vpop.trf.xlu0
        %v527 = vpop.trf.xlu0
        %v528 = vpop.trf.xlu0
        %v529 = vpop.trf.xlu0
        %v530 = vpop.trf.xlu0
        %v531 = vpop.trf.xlu0
        %v532 = vpop.trf.xlu0
        %v533 = vpop.trf.xlu0
        %v534 = vpop.trf.xlu0
        %v535 = vpop.trf.xlu0
        %v536 = vpop.trf.xlu0
        %v537 = vpop.trf.xlu0
        %v538 = vpop.trf.xlu0
        %v539 = vld [vmem:[#allocation7] sm:$0xff]
        %v540 = vld [vmem:[#allocation7 + $0x8] sm:$0xff]
        %v542 = vsel %vm233, %v395, 0
        %v545 = vsel %vm233, %v396, 0
        %v548 = vsel %vm233, %v397, 0
        %v551 = vsel %vm233, %v398, 0
        %v554 = vsel %vm233, %v399, 0
        %v557 = vsel %vm233, %v400, 0
        %v560 = vsel %vm233, %v401, 0
        %v563 = vsel %vm233, %v402, 0
        %v566 = vsel %vm233, %v403, 0
        %v569 = vsel %vm233, %v404, 0
        %v572 = vsel %vm233, %v405, 0
        %v575 = vsel %vm233, %v406, 0
        %v578 = vsel %vm233, %v407, 0
        %v581 = vsel %vm233, %v408, 0
        %v584 = vsel %vm233, %v409, 0
        %v587 = vsel %vm233, %v410, 0
        %v590 = vsel %vm233, %v427, 0
        %v593 = vsel %vm233, %v428, 0
        %v596 = vsel %vm233, %v429, 0
        %v599 = vsel %vm233, %v430, 0
        %v602 = vsel %vm233, %v431, 0
        %v605 = vsel %vm233, %v432, 0
        %v608 = vsel %vm233, %v433, 0
        %v611 = vsel %vm233, %v434, 0
        %v614 = vsel %vm233, %v435, 0
        %v617 = vsel %vm233, %v436, 0
        %v620 = vsel %vm233, %v437, 0
        %v623 = vsel %vm233, %v438, 0
        %v626 = vsel %vm233, %v439, 0
        %v629 = vsel %vm233, %v440, 0
        %v632 = vsel %vm233, %v441, 0
        %v635 = vsel %vm233, %v442, 0
        %v638 = vsel %vm233, %v459, 0
        %v641 = vsel %vm233, %v460, 0
        %v644 = vsel %vm233, %v461, 0
        %v647 = vsel %vm233, %v462, 0
        %v650 = vsel %vm233, %v463, 0
        %v653 = vsel %vm233, %v464, 0
        %v656 = vsel %vm233, %v465, 0
        %v659 = vsel %vm233, %v466, 0
        %v662 = vsel %vm233, %v467, 0
        %v665 = vsel %vm233, %v468, 0
        %v668 = vsel %vm233, %v469, 0
        %v671 = vsel %vm233, %v470, 0
        %v674 = vsel %vm233, %v471, 0
        %v677 = vsel %vm233, %v472, 0
        %v680 = vsel %vm233, %v473, 0
        %v683 = vsel %vm233, %v474, 0
        %v686 = vsel %vm233, %v491, 0
        %v689 = vsel %vm233, %v492, 0
        %v692 = vsel %vm233, %v493, 0
        %v695 = vsel %vm233, %v494, 0
        %v698 = vsel %vm233, %v495, 0
        %v701 = vsel %vm233, %v496, 0
        %v704 = vsel %vm233, %v497, 0
        %v707 = vsel %vm233, %v498, 0
        %v710 = vsel %vm233, %v499, 0
        %v713 = vsel %vm233, %v500, 0
        %v716 = vsel %vm233, %v501, 0
        %v719 = vsel %vm233, %v502, 0
        %v722 = vsel %vm233, %v503, 0
        %v725 = vsel %vm233, %v504, 0
        %v728 = vsel %vm233, %v505, 0
        %v731 = vsel %vm233, %v506, 0
        %v734 = vsel %vm233, %v523, 0
        %v737 = vsel %vm233, %v524, 0
        %v740 = vsel %vm233, %v525, 0
        %v743 = vsel %vm233, %v526, 0
        %v746 = vsel %vm233, %v527, 0
        %v749 = vsel %vm233, %v528, 0
        %v752 = vsel %vm233, %v529, 0
        %v755 = vsel %vm233, %v530, 0
        %v758 = vsel %vm233, %v531, 0
        %v761 = vsel %vm233, %v532, 0
        %v764 = vsel %vm233, %v533, 0
        %v767 = vsel %vm233, %v534, 0
        %v770 = vsel %vm233, %v535, 0
        %v773 = vsel %vm233, %v536, 0
        %v776 = vsel %vm233, %v537, 0
        %v779 = vsel %vm233, %v538, 0
        %781 = vmatprep.subr.mxu0 0.0
        %782 = vmatpush1.msra.mxu0 0.0
        %783 = vmatprep.subr.mxu0 0.0
        %784 = vmatpush1.msra.mxu0 0.0
        %785 = vmatprep.subr.mxu0 0.0
        %786 = vmatpush1.msra.mxu0 0.0
        %787 = vmatprep.subr.mxu0 0.0
        %788 = vmatpush1.msra.mxu0 0.0
        %789 = vmatprep.subr.mxu0 0.0
        %790 = vmatpush1.msra.mxu0 0.0
        %791 = vmatprep.subr.mxu0 0.0
        %792 = vmatpush1.msra.mxu0 0.0
        %793 = vmatprep.subr.mxu0 0.0
        %794 = vmatpush1.msra.mxu0 0.0
        %795 = vmatprep.subr.mxu0 0.0
        %796 = vmatpush1.msra.mxu0 0.0
        %797 = vmatprep.subr.mxu0 0.0
        %798 = vmatpush1.msra.mxu0 0.0
        %799 = vmatprep.subr.mxu0 0.0
        %800 = vmatpush1.msra.mxu0 0.0
        %801 = vmatprep.subr.mxu0 0.0
        %802 = vmatpush1.msra.mxu0 0.0
        %803 = vmatprep.subr.mxu0 0.0
        %804 = vmatpush1.msra.mxu0 0.0
        %805 = vmatprep.subr.mxu0 0.0
        %806 = vmatpush1.msra.mxu0 0.0
        %807 = vmatprep.subr.mxu0 0.0
        %808 = vmatpush1.msra.mxu0 0.0
        %809 = vmatprep.subr.mxu0 0.0
        %810 = vmatpush1.msra.mxu0 %v540
        %811 = vmatprep.subr.mxu0 0.0
        %812 = vmatpush1.msra.mxu0 %v539
        %813 = vmatprep.subr.mxu0 0.0
        %814 = vmatpush2.msra.mxu0 0.0
        %815 = vmatprep.subr.mxu0 0.0
        %816 = vmatpush2.msra.mxu0 0.0
        %817 = vmatprep.subr.mxu0 0.0
        %818 = vmatpush2.msra.mxu0 0.0
        %819 = vmatprep.subr.mxu0 0.0
        %820 = vmatpush2.msra.mxu0 0.0
        %821 = vmatprep.subr.mxu0 0.0
        %822 = vmatpush2.msra.mxu0 0.0
        %823 = vmatprep.subr.mxu0 0.0
        %824 = vmatpush2.msra.mxu0 0.0
        %825 = vmatprep.subr.mxu0 0.0
        %826 = vmatpush2.msra.mxu0 0.0
        %827 = vmatprep.subr.mxu0 0.0
        %828 = vmatpush2.msra.mxu0 0.0
        %829 = vmatprep.subr.mxu0 0.0
        %830 = vmatpush2.msra.mxu0 0.0
        %831 = vmatprep.subr.mxu0 0.0
        %832 = vmatpush2.msra.mxu0 0.0
        %833 = vmatprep.subr.mxu0 0.0
        %834 = vmatpush2.msra.mxu0 0.0
        %835 = vmatprep.subr.mxu0 0.0
        %836 = vmatpush2.msra.mxu0 0.0
        %837 = vmatprep.subr.mxu0 0.0
        %838 = vmatpush2.msra.mxu0 0.0
        %839 = vmatprep.subr.mxu0 0.0
        %840 = vmatpush2.msra.mxu0 0.0
        %841 = vmatprep.subr.mxu0 0.0
        %842 = vmatpush2.msra.mxu0 0.0
        %843 = vmatprep.subr.mxu0 0.0
        %844 = vmatpush2.msra.mxu0 0.0
        %845 = vmatprep.mubr.f32.mxu0 0.0
        %846 = vmatmul.mubr.f32.gmra.mxu0 %v542
        %v847 = vpop.f32.mrf.mxu0
        %v848 = vadd.f32 0.0, %v847
        %v849 = vpop.f32.mrf.mxu0
        %850 = vmatprep.mubr.f32.mxu0 0.0
        %851 = vmatmul.mubr.f32.gmra.mxu0 %v545
        %v852 = vpop.f32.mrf.mxu0
        %v853 = vadd.f32 0.0, %v852
        %v854 = vpop.f32.mrf.mxu0
        %855 = vmatprep.mubr.f32.mxu0 0.0
        %856 = vmatmul.mubr.f32.gmra.mxu0 %v548
        %v857 = vpop.f32.mrf.mxu0
        %v858 = vadd.f32 0.0, %v857
        %v859 = vpop.f32.mrf.mxu0
        %860 = vmatprep.mubr.f32.mxu0 0.0
        %861 = vmatmul.mubr.f32.gmra.mxu0 %v551
        %v862 = vpop.f32.mrf.mxu0
        %v863 = vadd.f32 0.0, %v862
        %v864 = vpop.f32.mrf.mxu0
        %865 = vmatprep.mubr.f32.mxu0 0.0
        %866 = vmatmul.mubr.f32.gmra.mxu0 %v554
        %v867 = vpop.f32.mrf.mxu0
        %v868 = vadd.f32 0.0, %v867
        %v869 = vpop.f32.mrf.mxu0
        %870 = vmatprep.mubr.f32.mxu0 0.0
        %871 = vmatmul.mubr.f32.gmra.mxu0 %v557
        %v872 = vpop.f32.mrf.mxu0
        %v873 = vadd.f32 0.0, %v872
        %v874 = vpop.f32.mrf.mxu0
        %875 = vmatprep.mubr.f32.mxu0 0.0
        %876 = vmatmul.mubr.f32.gmra.mxu0 %v560
        %v877 = vpop.f32.mrf.mxu0
        %v878 = vadd.f32 0.0, %v877
        %v879 = vpop.f32.mrf.mxu0
        %880 = vmatprep.mubr.f32.mxu0 0.0
        %881 = vmatmul.mubr.f32.gmra.mxu0 %v563
        %v882 = vpop.f32.mrf.mxu0
        %v883 = vadd.f32 0.0, %v882
        %v884 = vpop.f32.mrf.mxu0
        %885 = vmatprep.mubr.f32.mxu0 0.0
        %886 = vmatmul.mubr.f32.gmra.mxu0 %v566
        %v887 = vpop.f32.mrf.mxu0
        %v888 = vadd.f32 0.0, %v887
        %v889 = vpop.f32.mrf.mxu0
        %890 = vmatprep.mubr.f32.mxu0 0.0
        %891 = vmatmul.mubr.f32.gmra.mxu0 %v569
        %v892 = vpop.f32.mrf.mxu0
        %v893 = vadd.f32 0.0, %v892
        %v894 = vpop.f32.mrf.mxu0
        %895 = vmatprep.mubr.f32.mxu0 0.0
        %896 = vmatmul.mubr.f32.gmra.mxu0 %v572
        %v897 = vpop.f32.mrf.mxu0
        %v898 = vadd.f32 0.0, %v897
        %v899 = vpop.f32.mrf.mxu0
        %900 = vmatprep.mubr.f32.mxu0 0.0
        %901 = vmatmul.mubr.f32.gmra.mxu0 %v575
        %v902 = vpop.f32.mrf.mxu0
        %v903 = vadd.f32 0.0, %v902
        %v904 = vpop.f32.mrf.mxu0
        %905 = vmatprep.mubr.f32.mxu0 0.0
        %906 = vmatmul.mubr.f32.gmra.mxu0 %v578
        %v907 = vpop.f32.mrf.mxu0
        %v908 = vadd.f32 0.0, %v907
        %v909 = vpop.f32.mrf.mxu0
        %910 = vmatprep.mubr.f32.mxu0 0.0
        %911 = vmatmul.mubr.f32.gmra.mxu0 %v581
        %v912 = vpop.f32.mrf.mxu0
        %v913 = vadd.f32 0.0, %v912
        %v914 = vpop.f32.mrf.mxu0
        %915 = vmatprep.mubr.f32.mxu0 0.0
        %916 = vmatmul.mubr.f32.gmra.mxu0 %v584
        %v917 = vpop.f32.mrf.mxu0
        %v918 = vadd.f32 0.0, %v917
        %v919 = vpop.f32.mrf.mxu0
        %920 = vmatprep.mubr.f32.mxu0 0.0
        %921 = vmatmul.mubr.f32.gmra.mxu0 %v587
        %v922 = vpop.f32.mrf.mxu0
        %v923 = vadd.f32 0.0, %v922
        %v924 = vpop.f32.mrf.mxu0
        %925 = vmatprep.mubr.f32.mxu0 0.0
        %926 = vmatmul.mubr.f32.gmra.mxu0 %v590
        %v927 = vpop.f32.mrf.mxu0
        %v928 = vadd.f32 0.0, %v927
        %v929 = vpop.f32.mrf.mxu0
        %930 = vmatprep.mubr.f32.mxu0 0.0
        %931 = vmatmul.mubr.f32.gmra.mxu0 %v593
        %v932 = vpop.f32.mrf.mxu0
        %v933 = vadd.f32 0.0, %v932
        %v934 = vpop.f32.mrf.mxu0
        %935 = vmatprep.mubr.f32.mxu0 0.0
        %936 = vmatmul.mubr.f32.gmra.mxu0 %v596
        %v937 = vpop.f32.mrf.mxu0
        %v938 = vadd.f32 0.0, %v937
        %v939 = vpop.f32.mrf.mxu0
        %940 = vmatprep.mubr.f32.mxu0 0.0
        %941 = vmatmul.mubr.f32.gmra.mxu0 %v599
        %v942 = vpop.f32.mrf.mxu0
        %v943 = vadd.f32 0.0, %v942
        %v944 = vpop.f32.mrf.mxu0
        %945 = vmatprep.mubr.f32.mxu0 0.0
        %946 = vmatmul.mubr.f32.gmra.mxu0 %v602
        %v947 = vpop.f32.mrf.mxu0
        %v948 = vadd.f32 0.0, %v947
        %v949 = vpop.f32.mrf.mxu0
        %950 = vmatprep.mubr.f32.mxu0 0.0
        %951 = vmatmul.mubr.f32.gmra.mxu0 %v605
        %v952 = vpop.f32.mrf.mxu0
        %v953 = vadd.f32 0.0, %v952
        %v954 = vpop.f32.mrf.mxu0
        %955 = vmatprep.mubr.f32.mxu0 0.0
        %956 = vmatmul.mubr.f32.gmra.mxu0 %v608
        %v957 = vpop.f32.mrf.mxu0
        %v958 = vadd.f32 0.0, %v957
        %v959 = vpop.f32.mrf.mxu0
        %960 = vmatprep.mubr.f32.mxu0 0.0
        %961 = vmatmul.mubr.f32.gmra.mxu0 %v611
        %v962 = vpop.f32.mrf.mxu0
        %v963 = vadd.f32 0.0, %v962
        %v964 = vpop.f32.mrf.mxu0
        %965 = vmatprep.mubr.f32.mxu0 0.0
        %966 = vmatmul.mubr.f32.gmra.mxu0 %v614
        %v967 = vpop.f32.mrf.mxu0
        %v968 = vadd.f32 0.0, %v967
        %v969 = vpop.f32.mrf.mxu0
        %970 = vmatprep.mubr.f32.mxu0 0.0
        %971 = vmatmul.mubr.f32.gmra.mxu0 %v617
        %v972 = vpop.f32.mrf.mxu0
        %v973 = vadd.f32 0.0, %v972
        %v974 = vpop.f32.mrf.mxu0
        %975 = vmatprep.mubr.f32.mxu0 0.0
        %976 = vmatmul.mubr.f32.gmra.mxu0 %v620
        %v977 = vpop.f32.mrf.mxu0
        %v978 = vadd.f32 0.0, %v977
        %v979 = vpop.f32.mrf.mxu0
        %980 = vmatprep.mubr.f32.mxu0 0.0
        %981 = vmatmul.mubr.f32.gmra.mxu0 %v623
        %v982 = vpop.f32.mrf.mxu0
        %v983 = vadd.f32 0.0, %v982
        %v984 = vpop.f32.mrf.mxu0
        %985 = vmatprep.mubr.f32.mxu0 0.0
        %986 = vmatmul.mubr.f32.gmra.mxu0 %v626
        %v987 = vpop.f32.mrf.mxu0
        %v988 = vadd.f32 0.0, %v987
        %v989 = vpop.f32.mrf.mxu0
        %990 = vmatprep.mubr.f32.mxu0 0.0
        %991 = vmatmul.mubr.f32.gmra.mxu0 %v629
        %v992 = vpop.f32.mrf.mxu0
        %v993 = vadd.f32 0.0, %v992
        %v994 = vpop.f32.mrf.mxu0
        %995 = vmatprep.mubr.f32.mxu0 0.0
        %996 = vmatmul.mubr.f32.gmra.mxu0 %v632
        %v997 = vpop.f32.mrf.mxu0
        %v998 = vadd.f32 0.0, %v997
        %v999 = vpop.f32.mrf.mxu0
        %1000 = vmatprep.mubr.f32.mxu0 0.0
        %1001 = vmatmul.mubr.f32.gmra.mxu0 %v635
        %v1002 = vpop.f32.mrf.mxu0
        %v1003 = vadd.f32 0.0, %v1002
        %v1004 = vpop.f32.mrf.mxu0
        %1005 = vmatprep.mubr.f32.mxu0 0.0
        %1006 = vmatmul.mubr.f32.gmra.mxu0 %v638
        %v1007 = vpop.f32.mrf.mxu0
        %v1008 = vadd.f32 0.0, %v1007
        %v1009 = vpop.f32.mrf.mxu0
        %1010 = vmatprep.mubr.f32.mxu0 0.0
        %1011 = vmatmul.mubr.f32.gmra.mxu0 %v641
        %v1012 = vpop.f32.mrf.mxu0
        %v1013 = vadd.f32 0.0, %v1012
        %v1014 = vpop.f32.mrf.mxu0
        %1015 = vmatprep.mubr.f32.mxu0 0.0
        %1016 = vmatmul.mubr.f32.gmra.mxu0 %v644
        %v1017 = vpop.f32.mrf.mxu0
        %v1018 = vadd.f32 0.0, %v1017
        %v1019 = vpop.f32.mrf.mxu0
        %1020 = vmatprep.mubr.f32.mxu0 0.0
        %1021 = vmatmul.mubr.f32.gmra.mxu0 %v647
        %v1022 = vpop.f32.mrf.mxu0
        %v1023 = vadd.f32 0.0, %v1022
        %v1024 = vpop.f32.mrf.mxu0
        %1025 = vmatprep.mubr.f32.mxu0 0.0
        %1026 = vmatmul.mubr.f32.gmra.mxu0 %v650
        %v1027 = vpop.f32.mrf.mxu0
        %v1028 = vadd.f32 0.0, %v1027
        %v1029 = vpop.f32.mrf.mxu0
        %1030 = vmatprep.mubr.f32.mxu0 0.0
        %1031 = vmatmul.mubr.f32.gmra.mxu0 %v653
        %v1032 = vpop.f32.mrf.mxu0
        %v1033 = vadd.f32 0.0, %v1032
        %v1034 = vpop.f32.mrf.mxu0
        %1035 = vmatprep.mubr.f32.mxu0 0.0
        %1036 = vmatmul.mubr.f32.gmra.mxu0 %v656
        %v1037 = vpop.f32.mrf.mxu0
        %v1038 = vadd.f32 0.0, %v1037
        %v1039 = vpop.f32.mrf.mxu0
        %1040 = vmatprep.mubr.f32.mxu0 0.0
        %1041 = vmatmul.mubr.f32.gmra.mxu0 %v659
        %v1042 = vpop.f32.mrf.mxu0
        %v1043 = vadd.f32 0.0, %v1042
        %v1044 = vpop.f32.mrf.mxu0
        %1045 = vmatprep.mubr.f32.mxu0 0.0
        %1046 = vmatmul.mubr.f32.gmra.mxu0 %v662
        %v1047 = vpop.f32.mrf.mxu0
        %v1048 = vadd.f32 0.0, %v1047
        %v1049 = vpop.f32.mrf.mxu0
        %1050 = vmatprep.mubr.f32.mxu0 0.0
        %1051 = vmatmul.mubr.f32.gmra.mxu0 %v665
        %v1052 = vpop.f32.mrf.mxu0
        %v1053 = vadd.f32 0.0, %v1052
        %v1054 = vpop.f32.mrf.mxu0
        %1055 = vmatprep.mubr.f32.mxu0 0.0
        %1056 = vmatmul.mubr.f32.gmra.mxu0 %v668
        %v1057 = vpop.f32.mrf.mxu0
        %v1058 = vadd.f32 0.0, %v1057
        %v1059 = vpop.f32.mrf.mxu0
        %1060 = vmatprep.mubr.f32.mxu0 0.0
        %1061 = vmatmul.mubr.f32.gmra.mxu0 %v671
        %v1062 = vpop.f32.mrf.mxu0
        %v1063 = vadd.f32 0.0, %v1062
        %v1064 = vpop.f32.mrf.mxu0
        %1065 = vmatprep.mubr.f32.mxu0 0.0
        %1066 = vmatmul.mubr.f32.gmra.mxu0 %v674
        %v1067 = vpop.f32.mrf.mxu0
        %v1068 = vadd.f32 0.0, %v1067
        %v1069 = vpop.f32.mrf.mxu0
        %1070 = vmatprep.mubr.f32.mxu0 0.0
        %1071 = vmatmul.mubr.f32.gmra.mxu0 %v677
        %v1072 = vpop.f32.mrf.mxu0
        %v1073 = vadd.f32 0.0, %v1072
        %v1074 = vpop.f32.mrf.mxu0
        %1075 = vmatprep.mubr.f32.mxu0 0.0
        %1076 = vmatmul.mubr.f32.gmra.mxu0 %v680
        %v1077 = vpop.f32.mrf.mxu0
        %v1078 = vadd.f32 0.0, %v1077
        %v1079 = vpop.f32.mrf.mxu0
        %1080 = vmatprep.mubr.f32.mxu0 0.0
        %1081 = vmatmul.mubr.f32.gmra.mxu0 %v683
        %v1082 = vpop.f32.mrf.mxu0
        %v1083 = vadd.f32 0.0, %v1082
        %v1084 = vpop.f32.mrf.mxu0
        %1085 = vmatprep.mubr.f32.mxu0 0.0
        %1086 = vmatmul.mubr.f32.gmra.mxu0 %v686
        %v1087 = vpop.f32.mrf.mxu0
        %v1088 = vadd.f32 0.0, %v1087
        %v1089 = vpop.f32.mrf.mxu0
        %1090 = vmatprep.mubr.f32.mxu0 0.0
        %1091 = vmatmul.mubr.f32.gmra.mxu0 %v689
        %v1092 = vpop.f32.mrf.mxu0
        %v1093 = vadd.f32 0.0, %v1092
        %v1094 = vpop.f32.mrf.mxu0
        %1095 = vmatprep.mubr.f32.mxu0 0.0
        %1096 = vmatmul.mubr.f32.gmra.mxu0 %v692
        %v1097 = vpop.f32.mrf.mxu0
        %v1098 = vadd.f32 0.0, %v1097
        %v1099 = vpop.f32.mrf.mxu0
        %1100 = vmatprep.mubr.f32.mxu0 0.0
        %1101 = vmatmul.mubr.f32.gmra.mxu0 %v695
        %v1102 = vpop.f32.mrf.mxu0
        %v1103 = vadd.f32 0.0, %v1102
        %v1104 = vpop.f32.mrf.mxu0
        %1105 = vmatprep.mubr.f32.mxu0 0.0
        %1106 = vmatmul.mubr.f32.gmra.mxu0 %v698
        %v1107 = vpop.f32.mrf.mxu0
        %v1108 = vadd.f32 0.0, %v1107
        %v1109 = vpop.f32.mrf.mxu0
        %1110 = vmatprep.mubr.f32.mxu0 0.0
        %1111 = vmatmul.mubr.f32.gmra.mxu0 %v701
        %v1112 = vpop.f32.mrf.mxu0
        %v1113 = vadd.f32 0.0, %v1112
        %v1114 = vpop.f32.mrf.mxu0
        %1115 = vmatprep.mubr.f32.mxu0 0.0
        %1116 = vmatmul.mubr.f32.gmra.mxu0 %v704
        %v1117 = vpop.f32.mrf.mxu0
        %v1118 = vadd.f32 0.0, %v1117
        %v1119 = vpop.f32.mrf.mxu0
        %1120 = vmatprep.mubr.f32.mxu0 0.0
        %1121 = vmatmul.mubr.f32.gmra.mxu0 %v707
        %v1122 = vpop.f32.mrf.mxu0
        %v1123 = vadd.f32 0.0, %v1122
        %v1124 = vpop.f32.mrf.mxu0
        %1125 = vmatprep.mubr.f32.mxu0 0.0
        %1126 = vmatmul.mubr.f32.gmra.mxu0 %v710
        %v1127 = vpop.f32.mrf.mxu0
        %v1128 = vadd.f32 0.0, %v1127
        %v1129 = vpop.f32.mrf.mxu0
        %1130 = vmatprep.mubr.f32.mxu0 0.0
        %1131 = vmatmul.mubr.f32.gmra.mxu0 %v713
        %v1132 = vpop.f32.mrf.mxu0
        %v1133 = vadd.f32 0.0, %v1132
        %v1134 = vpop.f32.mrf.mxu0
        %1135 = vmatprep.mubr.f32.mxu0 0.0
        %1136 = vmatmul.mubr.f32.gmra.mxu0 %v716
        %v1137 = vpop.f32.mrf.mxu0
        %v1138 = vadd.f32 0.0, %v1137
        %v1139 = vpop.f32.mrf.mxu0
        %1140 = vmatprep.mubr.f32.mxu0 0.0
        %1141 = vmatmul.mubr.f32.gmra.mxu0 %v719
        %v1142 = vpop.f32.mrf.mxu0
        %v1143 = vadd.f32 0.0, %v1142
        %v1144 = vpop.f32.mrf.mxu0
        %1145 = vmatprep.mubr.f32.mxu0 0.0
        %1146 = vmatmul.mubr.f32.gmra.mxu0 %v722
        %v1147 = vpop.f32.mrf.mxu0
        %v1148 = vadd.f32 0.0, %v1147
        %v1149 = vpop.f32.mrf.mxu0
        %1150 = vmatprep.mubr.f32.mxu0 0.0
        %1151 = vmatmul.mubr.f32.gmra.mxu0 %v725
        %v1152 = vpop.f32.mrf.mxu0
        %v1153 = vadd.f32 0.0, %v1152
        %v1154 = vpop.f32.mrf.mxu0
        %1155 = vmatprep.mubr.f32.mxu0 0.0
        %1156 = vmatmul.mubr.f32.gmra.mxu0 %v728
        %v1157 = vpop.f32.mrf.mxu0
        %v1158 = vadd.f32 0.0, %v1157
        %v1159 = vpop.f32.mrf.mxu0
        %1160 = vmatprep.mubr.f32.mxu0 0.0
        %1161 = vmatmul.mubr.f32.gmra.mxu0 %v731
        %v1162 = vpop.f32.mrf.mxu0
        %v1163 = vadd.f32 0.0, %v1162
        %v1164 = vpop.f32.mrf.mxu0
        %1165 = vmatprep.mubr.f32.mxu0 0.0
        %1166 = vmatmul.mubr.f32.gmra.mxu0 %v734
        %v1167 = vpop.f32.mrf.mxu0
        %v1168 = vadd.f32 0.0, %v1167
        %v1169 = vpop.f32.mrf.mxu0
        %1170 = vmatprep.mubr.f32.mxu0 0.0
        %1171 = vmatmul.mubr.f32.gmra.mxu0 %v737
        %v1172 = vpop.f32.mrf.mxu0
        %v1173 = vadd.f32 0.0, %v1172
        %v1174 = vpop.f32.mrf.mxu0
        %1175 = vmatprep.mubr.f32.mxu0 0.0
        %1176 = vmatmul.mubr.f32.gmra.mxu0 %v740
        %v1177 = vpop.f32.mrf.mxu0
        %v1178 = vadd.f32 0.0, %v1177
        %v1179 = vpop.f32.mrf.mxu0
        %1180 = vmatprep.mubr.f32.mxu0 0.0
        %1181 = vmatmul.mubr.f32.gmra.mxu0 %v743
        %v1182 = vpop.f32.mrf.mxu0
        %v1183 = vadd.f32 0.0, %v1182
        %v1184 = vpop.f32.mrf.mxu0
        %1185 = vmatprep.mubr.f32.mxu0 0.0
        %1186 = vmatmul.mubr.f32.gmra.mxu0 %v746
        %v1187 = vpop.f32.mrf.mxu0
        %v1188 = vadd.f32 0.0, %v1187
        %v1189 = vpop.f32.mrf.mxu0
        %1190 = vmatprep.mubr.f32.mxu0 0.0
        %1191 = vmatmul.mubr.f32.gmra.mxu0 %v749
        %v1192 = vpop.f32.mrf.mxu0
        %v1193 = vadd.f32 0.0, %v1192
        %v1194 = vpop.f32.mrf.mxu0
        %1195 = vmatprep.mubr.f32.mxu0 0.0
        %1196 = vmatmul.mubr.f32.gmra.mxu0 %v752
        %v1197 = vpop.f32.mrf.mxu0
        %v1198 = vadd.f32 0.0, %v1197
        %v1199 = vpop.f32.mrf.mxu0
        %1200 = vmatprep.mubr.f32.mxu0 0.0
        %1201 = vmatmul.mubr.f32.gmra.mxu0 %v755
        %v1202 = vpop.f32.mrf.mxu0
        %v1203 = vadd.f32 0.0, %v1202
        %v1204 = vpop.f32.mrf.mxu0
        %1205 = vmatprep.mubr.f32.mxu0 0.0
        %1206 = vmatmul.mubr.f32.gmra.mxu0 %v758
        %v1207 = vpop.f32.mrf.mxu0
        %v1208 = vadd.f32 0.0, %v1207
        %v1209 = vpop.f32.mrf.mxu0
        %1210 = vmatprep.mubr.f32.mxu0 0.0
        %1211 = vmatmul.mubr.f32.gmra.mxu0 %v761
        %v1212 = vpop.f32.mrf.mxu0
        %v1213 = vadd.f32 0.0, %v1212
        %v1214 = vpop.f32.mrf.mxu0
        %1215 = vmatprep.mubr.f32.mxu0 0.0
        %1216 = vmatmul.mubr.f32.gmra.mxu0 %v764
        %v1217 = vpop.f32.mrf.mxu0
        %v1218 = vadd.f32 0.0, %v1217
        %v1219 = vpop.f32.mrf.mxu0
        %1220 = vmatprep.mubr.f32.mxu0 0.0
        %1221 = vmatmul.mubr.f32.gmra.mxu0 %v767
        %v1222 = vpop.f32.mrf.mxu0
        %v1223 = vadd.f32 0.0, %v1222
        %v1224 = vpop.f32.mrf.mxu0
        %1225 = vmatprep.mubr.f32.mxu0 0.0
        %1226 = vmatmul.mubr.f32.gmra.mxu0 %v770
        %v1227 = vpop.f32.mrf.mxu0
        %v1228 = vadd.f32 0.0, %v1227
        %v1229 = vpop.f32.mrf.mxu0
        %1230 = vmatprep.mubr.f32.mxu0 0.0
        %1231 = vmatmul.mubr.f32.gmra.mxu0 %v773
        %v1232 = vpop.f32.mrf.mxu0
        %v1233 = vadd.f32 0.0, %v1232
        %v1234 = vpop.f32.mrf.mxu0
        %1235 = vmatprep.mubr.f32.mxu0 0.0
        %1236 = vmatmul.mubr.f32.gmra.mxu0 %v776
        %v1237 = vpop.f32.mrf.mxu0
        %v1238 = vadd.f32 0.0, %v1237
        %v1239 = vpop.f32.mrf.mxu0
        %1240 = vmatprep.mubr.f32.mxu0 0.0
        %1241 = vmatmul.mubr.f32.gmra.mxu0 %v779
        %v1242 = vpop.f32.mrf.mxu0
        %v1243 = vadd.f32 0.0, %v1242
        %v1244 = vpop.f32.mrf.mxu0
        %1245 = vdwg.mxu0
        %1246 = vxpose.xlu0.b32.start [1/16] %v848, 128
        %1247 = vxpose.xlu0.b32.cont [2/16] %v853, 128
        %1248 = vxpose.xlu0.b32.cont [3/16] %v858, 128
        %1249 = vxpose.xlu0.b32.cont [4/16] %v863, 128
        %1250 = vxpose.xlu0.b32.cont [5/16] %v868, 128
        %1251 = vxpose.xlu0.b32.cont [6/16] %v873, 128
        %1252 = vxpose.xlu0.b32.cont [7/16] %v878, 128
        %1253 = vxpose.xlu0.b32.cont [8/16] %v883, 128
        %1254 = vxpose.xlu0.b32.cont [9/16] %v888, 128
        %1255 = vxpose.xlu0.b32.cont [10/16] %v893, 128
        %1256 = vxpose.xlu0.b32.cont [11/16] %v898, 128
        %1257 = vxpose.xlu0.b32.cont [12/16] %v903, 128
        %1258 = vxpose.xlu0.b32.cont [13/16] %v908, 128
        %1259 = vxpose.xlu0.b32.cont [14/16] %v913, 128
        %1260 = vxpose.xlu0.b32.cont [15/16] %v918, 128
        %1261 = vxpose.xlu0.b32.end [16/16] %v923, 128
        %v1262 = vpop.trf.xlu0
        %v1263 = vpop.trf.xlu0
        %v1264 = vpop.trf.xlu0
        %v1265 = vpop.trf.xlu0
        %v1266 = vpop.trf.xlu0
        %v1267 = vpop.trf.xlu0
        %v1268 = vpop.trf.xlu0
        %v1269 = vpop.trf.xlu0
        %v1270 = vpop.trf.xlu0
        %v1271 = vpop.trf.xlu0
        %v1272 = vpop.trf.xlu0
        %v1273 = vpop.trf.xlu0
        %v1274 = vpop.trf.xlu0
        %v1275 = vpop.trf.xlu0
        %v1276 = vpop.trf.xlu0
        %v1277 = vpop.trf.xlu0
        %1278 = vxpose.xlu0.b32.start [1/16] %v928, 128
        %1279 = vxpose.xlu0.b32.cont [2/16] %v933, 128
        %1280 = vxpose.xlu0.b32.cont [3/16] %v938, 128
        %1281 = vxpose.xlu0.b32.cont [4/16] %v943, 128
        %1282 = vxpose.xlu0.b32.cont [5/16] %v948, 128
        %1283 = vxpose.xlu0.b32.cont [6/16] %v953, 128
        %1284 = vxpose.xlu0.b32.cont [7/16] %v958, 128
        %1285 = vxpose.xlu0.b32.cont [8/16] %v963, 128
        %1286 = vxpose.xlu0.b32.cont [9/16] %v968, 128
        %1287 = vxpose.xlu0.b32.cont [10/16] %v973, 128
        %1288 = vxpose.xlu0.b32.cont [11/16] %v978, 128
        %1289 = vxpose.xlu0.b32.cont [12/16] %v983, 128
        %1290 = vxpose.xlu0.b32.cont [13/16] %v988, 128
        %1291 = vxpose.xlu0.b32.cont [14/16] %v993, 128
        %1292 = vxpose.xlu0.b32.cont [15/16] %v998, 128
        %1293 = vxpose.xlu0.b32.end [16/16] %v1003, 128
        %v1294 = vpop.trf.xlu0
        %v1295 = vpop.trf.xlu0
        %v1296 = vpop.trf.xlu0
        %v1297 = vpop.trf.xlu0
        %v1298 = vpop.trf.xlu0
        %v1299 = vpop.trf.xlu0
        %v1300 = vpop.trf.xlu0
        %v1301 = vpop.trf.xlu0
        %v1302 = vpop.trf.xlu0
        %v1303 = vpop.trf.xlu0
        %v1304 = vpop.trf.xlu0
        %v1305 = vpop.trf.xlu0
        %v1306 = vpop.trf.xlu0
        %v1307 = vpop.trf.xlu0
        %v1308 = vpop.trf.xlu0
        %v1309 = vpop.trf.xlu0
        %1310 = vxpose.xlu0.b32.start [1/16] %v1008, 128
        %1311 = vxpose.xlu0.b32.cont [2/16] %v1013, 128
        %1312 = vxpose.xlu0.b32.cont [3/16] %v1018, 128
        %1313 = vxpose.xlu0.b32.cont [4/16] %v1023, 128
        %1314 = vxpose.xlu0.b32.cont [5/16] %v1028, 128
        %1315 = vxpose.xlu0.b32.cont [6/16] %v1033, 128
        %1316 = vxpose.xlu0.b32.cont [7/16] %v1038, 128
        %1317 = vxpose.xlu0.b32.cont [8/16] %v1043, 128
        %1318 = vxpose.xlu0.b32.cont [9/16] %v1048, 128
        %1319 = vxpose.xlu0.b32.cont [10/16] %v1053, 128
        %1320 = vxpose.xlu0.b32.cont [11/16] %v1058, 128
        %1321 = vxpose.xlu0.b32.cont [12/16] %v1063, 128
        %1322 = vxpose.xlu0.b32.cont [13/16] %v1068, 128
        %1323 = vxpose.xlu0.b32.cont [14/16] %v1073, 128
        %1324 = vxpose.xlu0.b32.cont [15/16] %v1078, 128
        %1325 = vxpose.xlu0.b32.end [16/16] %v1083, 128
        %v1326 = vpop.trf.xlu0
        %v1327 = vpop.trf.xlu0
        %v1328 = vpop.trf.xlu0
        %v1329 = vpop.trf.xlu0
        %v1330 = vpop.trf.xlu0
        %v1331 = vpop.trf.xlu0
        %v1332 = vpop.trf.xlu0
        %v1333 = vpop.trf.xlu0
        %v1334 = vpop.trf.xlu0
        %v1335 = vpop.trf.xlu0
        %v1336 = vpop.trf.xlu0
        %v1337 = vpop.trf.xlu0
        %v1338 = vpop.trf.xlu0
        %v1339 = vpop.trf.xlu0
        %v1340 = vpop.trf.xlu0
        %v1341 = vpop.trf.xlu0
        %1342 = vxpose.xlu0.b32.start [1/16] %v1088, 128
        %1343 = vxpose.xlu0.b32.cont [2/16] %v1093, 128
        %1344 = vxpose.xlu0.b32.cont [3/16] %v1098, 128
        %1345 = vxpose.xlu0.b32.cont [4/16] %v1103, 128
        %1346 = vxpose.xlu0.b32.cont [5/16] %v1108, 128
        %1347 = vxpose.xlu0.b32.cont [6/16] %v1113, 128
        %1348 = vxpose.xlu0.b32.cont [7/16] %v1118, 128
        %1349 = vxpose.xlu0.b32.cont [8/16] %v1123, 128
        %1350 = vxpose.xlu0.b32.cont [9/16] %v1128, 128
        %1351 = vxpose.xlu0.b32.cont [10/16] %v1133, 128
        %1352 = vxpose.xlu0.b32.cont [11/16] %v1138, 128
        %1353 = vxpose.xlu0.b32.cont [12/16] %v1143, 128
        %1354 = vxpose.xlu0.b32.cont [13/16] %v1148, 128
        %1355 = vxpose.xlu0.b32.cont [14/16] %v1153, 128
        %1356 = vxpose.xlu0.b32.cont [15/16] %v1158, 128
        %1357 = vxpose.xlu0.b32.end [16/16] %v1163, 128
        %v1358 = vpop.trf.xlu0
        %v1359 = vpop.trf.xlu0
        %v1360 = vpop.trf.xlu0
        %v1361 = vpop.trf.xlu0
        %v1362 = vpop.trf.xlu0
        %v1363 = vpop.trf.xlu0
        %v1364 = vpop.trf.xlu0
        %v1365 = vpop.trf.xlu0
        %v1366 = vpop.trf.xlu0
        %v1367 = vpop.trf.xlu0
        %v1368 = vpop.trf.xlu0
        %v1369 = vpop.trf.xlu0
        %v1370 = vpop.trf.xlu0
        %v1371 = vpop.trf.xlu0
        %v1372 = vpop.trf.xlu0
        %v1373 = vpop.trf.xlu0
        %1374 = vxpose.xlu0.b32.start [1/16] %v1168, 128
        %1375 = vxpose.xlu0.b32.cont [2/16] %v1173, 128
        %1376 = vxpose.xlu0.b32.cont [3/16] %v1178, 128
        %1377 = vxpose.xlu0.b32.cont [4/16] %v1183, 128
        %1378 = vxpose.xlu0.b32.cont [5/16] %v1188, 128
        %1379 = vxpose.xlu0.b32.cont [6/16] %v1193, 128
        %1380 = vxpose.xlu0.b32.cont [7/16] %v1198, 128
        %1381 = vxpose.xlu0.b32.cont [8/16] %v1203, 128
        %1382 = vxpose.xlu0.b32.cont [9/16] %v1208, 128
        %1383 = vxpose.xlu0.b32.cont [10/16] %v1213, 128
        %1384 = vxpose.xlu0.b32.cont [11/16] %v1218, 128
        %1385 = vxpose.xlu0.b32.cont [12/16] %v1223, 128
        %1386 = vxpose.xlu0.b32.cont [13/16] %v1228, 128
        %1387 = vxpose.xlu0.b32.cont [14/16] %v1233, 128
        %1388 = vxpose.xlu0.b32.cont [15/16] %v1238, 128
        %1389 = vxpose.xlu0.b32.end [16/16] %v1243, 128
        %v1390 = vpop.trf.xlu0
        %v1391 = vpop.trf.xlu0
        %v1392 = vpop.trf.xlu0
        %v1393 = vpop.trf.xlu0
        %v1394 = vpop.trf.xlu0
        %v1395 = vpop.trf.xlu0
        %v1396 = vpop.trf.xlu0
        %v1397 = vpop.trf.xlu0
        %v1398 = vpop.trf.xlu0
        %v1399 = vpop.trf.xlu0
        %v1400 = vpop.trf.xlu0
        %v1401 = vpop.trf.xlu0
        %v1402 = vpop.trf.xlu0
        %v1403 = vpop.trf.xlu0
        %v1404 = vpop.trf.xlu0
        %v1405 = vpop.trf.xlu0
        %1406 = vst [vmem:[%s218] sm:$0xff] %v1262
        %1407 = vst [vmem:[%s218 + $0x8] sm:$0xff] %v1294
        %1408 = vst [vmem:[%s218 + $0x10] sm:$0xff] %v1326
        %1409 = vst [vmem:[%s218 + $0x18] sm:$0xff] %v1358
        %1410 = vst [vmem:[%s218 + $0x20] sm:$0xff] %v1390
        %s1411 = sand.u32 %s97, 1
        %s1412 = scalar_lea.sflag [#allocation4], %s1411
        %s1413 = sand.u32 %s97, 1
        %s1414 = smul.addr %s1413, 40
        %s1415 = scalar_lea.vmem [#allocation8], %s1414
        // Predicated region
        $region45: #{fn.1} parent=31 // pred_check
          %p1416 = pneg %p107
        $region46: #{fn.1} parent=31 // pred_check_branch
          %1418 = sbr.rel (%p1416) target = $region48
        $region47: #{fn.1} parent=31 // pred_region
          %s1419 = smul.u32 5, %s21
          %s1421 = ssub.s32 640, 640
          %1422 = vsyncadd %s1412, %s1421
          %s1423 = smul.addr %s1419, 128
          %s1424 = scalar_lea.hbm %s3, %s1423
          %s1425 = sshll.u32 %s1415, 4
          %s1426 = int_to_ptr.vmem [resolvable:$true] %s1425
          %1431 = dma.vmem_to_hbm [thread:$0]  %s1426, 640, %s1424, %s1412, 128, 128, 8
        $region48: #{fn.1} parent=31 // pred_fallthru
          _
      $region32: #{fn.1} parent=5 // pred_fallthru
        _
      %p1432 = scmp.le.s32.totalorder 2, %s16
      // Predicated region
      $region49: #{fn.1} parent=5 // pred_check
        %p1433 = pneg %p1432
      $region50: #{fn.1} parent=5 // pred_check_branch
        %1435 = sbr.rel (%p1433) target = $region52
      $region51: #{fn.1} parent=5 // pred_region
        %s1436 = ssub.s32 %s16, 2
        // Predicated region
        $region53: #{fn.1} parent=51 // pred_check
          %p1437 = pneg %p113
        $region54: #{fn.1} parent=51 // pred_check_branch
          %1439 = sbr.rel (%p1437) target = $region56
        $region55: #{fn.1} parent=51 // pred_region
          %s1440 = sand.u32 %s98, 1
          %s1441 = scalar_lea.sflag [#allocation4], %s1440
          %s1442 = sand.u32 %s98, 1
          %s1443 = smul.addr %s1442, 40
          %s1444 = scalar_lea.vmem [#allocation8], %s1443
          %1445 = dma.done %s1441, 640
        $region56: #{fn.1} parent=51 // pred_fallthru
          _
      $region52: #{fn.1} parent=5 // pred_fallthru
        _
    $region6: #{fn.1} parent=1 // loop_footer
      %s20 = sadd.s32 1, %s16
    $region7: #{fn.1} parent=1 // loop_footer_branch
      %15 = sbr.rel target = $region3
    $region8: #{fn.1} parent=1 // loop_exit
      _
    %1446 = vsyncpa [#allocation3], 1
    %s1447 = scalar_lea.sflag [#allocation3], 1
    %1448 = vsyncpa %s1447, 1
    %1449 = vsyncpa [#allocation6], 1
    %1450 = vsyncpa [#allocation4], 1
    %s1451 = scalar_lea.sflag [#allocation4], 1
    %1452 = vsyncpa %s1451, 1

</llo_original>
